<compile_context>
chip_gen: v6e
topology: v6e:2x2x1
jax: 0.10.0
libtpu: 0.0.40
codegen_flags: <defaults>
</compile_context>

<pallas_src>
import functools

import jax
import jax.numpy as jnp
from jax.experimental import pallas as pl
from jax.experimental.pallas import tpu as pltpu

HIDDEN = 128   # DQN hidden width (fc1/fc2 out)
LANE = 128     # TPU lane width; fc3 output / layer-1 K are padded to this


def _round_up(n, m):
    return ((n + m - 1) // m) * m


def dqn_mlp_kernel(x_ref, w_ref, b_ref, o_ref, *, in_pad, hidden):
    # Resident bf16 weight slab (rows): [0,in_pad)=W1, [in_pad,+hidden)=W2, next hidden=W3 (col-padded).
    w1 = w_ref[0:in_pad, :]
    w2 = w_ref[in_pad:in_pad + hidden, :]
    w3 = w_ref[in_pad + hidden:in_pad + 2 * hidden, :]

    # All three biases live in one (3, 128) f32 slab == one vreg tile; load once, slice values.
    b = b_ref[...]
    b1, b2, b3 = b[0:1, :], b[1:2, :], b[2:3, :]

    # bf16 x bf16 -> f32 accumulate on the MXU; elementwise bias/ReLU kept in f32 on the VPU.
    x = x_ref[...].astype(jnp.bfloat16)
    h1 = jnp.maximum(jnp.dot(x, w1, preferred_element_type=jnp.float32) + b1, 0.0)
    h2 = jnp.maximum(
        jnp.dot(h1.astype(jnp.bfloat16), w2, preferred_element_type=jnp.float32) + b2, 0.0)
    out = jnp.dot(h2.astype(jnp.bfloat16), w3, preferred_element_type=jnp.float32) + b3
    # Lane-dense (tb, 128) unmasked store.
    o_ref[...] = out.astype(o_ref.dtype)


def _pick_tile(batch, tb_max):
    """Largest tile <= tb_max that covers the batch in as few steps as possible,
    but keeps >= 2 tiles when the batch is big enough (v7x megacore sharding)."""
    half = _round_up(max((batch + 1) // 2, 1), 8)
    return min(tb_max, max(half, 8))


def stage_batch(x, params, *, tb_max=512):
    """Optional staging helper: pre-pad a replay batch to (b_pad, in_pad) once at sample
    time so dqn_forward emits zero pad ops on the hot path."""
    in_pad = params["in_pad"]
    B, in_dim = x.shape
    tb = _pick_tile(B, tb_max)
    b_pad = _round_up(B, tb)
    if in_dim != in_pad or b_pad != B:
        x = jnp.pad(x, ((0, b_pad - B), (0, in_pad - in_dim)))
    return x


def dqn_forward(x, params, *, tb_max=512):
    """x: (B, input_dim) float32 (or already staged to (b_pad, in_pad)).
    params: packed slabs from init_dqn_params. Returns (B, output_dim) float32 Q-values."""
    w_slab = params["w_slab"]     # (in_pad + 2*HIDDEN, 128) bf16, resident in VMEM
    b_slab = params["b_slab"]     # (3, 128) f32, resident in VMEM
    in_pad = params["in_pad"]
    out_dim = params["out_dim"]
    B, in_dim = x.shape

    # Conditional padding: a no-op (no XLA pad emitted) when the caller pre-staged the batch.
    if in_dim != in_pad:
        x = jnp.pad(x, ((0, 0), (0, in_pad - in_dim)))

    tb = _pick_tile(B, tb_max)
    b_pad = _round_up(B, tb)
    if b_pad != B:
        x = jnp.pad(x, ((0, b_pad - B), (0, 0)))

    grid = (b_pad // tb,)
    n_out = LANE  # lane-dense padded output width

    # Advisory cost (counts padded work; harmless).
    flops = 2 * b_pad * (in_pad * HIDDEN + HIDDEN * HIDDEN + HIDDEN * n_out)
    bytes_accessed = 4 * x.size + 2 * w_slab.size + 4 * b_slab.size + 4 * b_pad * n_out
    cost = pl.CostEstimate(flops=flops, transcendentals=0, bytes_accessed=bytes_accessed)

    kernel = functools.partial(dqn_mlp_kernel, in_pad=in_pad, hidden=HIDDEN)

    out_padded = pl.pallas_call(
        kernel,
        out_shape=jax.ShapeDtypeStruct((b_pad, n_out), jnp.float32),
        grid=grid,
        in_specs=[
            pl.BlockSpec((tb, in_pad), lambda i: (i, 0)),       # x: one batch tile / step
            pl.BlockSpec(w_slab.shape, lambda i: (0, 0)),       # weights: resident, DMA'd once
            pl.BlockSpec(b_slab.shape, lambda i: (0, 0)),       # biases : resident, DMA'd once
        ],
        out_specs=pl.BlockSpec((tb, n_out), lambda i: (i, 0)),  # unmasked (tb,128) stores
        compiler_params=pltpu.CompilerParams(
            dimension_semantics=("parallel",)),                  # shard batch tiles across v7x TCs
        cost_estimate=cost,
    )(x, w_slab, b_slab)

    # TODO(synk): for online (B=1) action selection, fuse argmax over lanes < out_dim into the
    # kernel and emit (tb, 1) instead of the padded 128-wide Q slab + this wrapper slice.
    return out_padded[:B, :out_dim]


def init_dqn_params(key, input_dim, output_dim, hidden=HIDDEN):
    """PyTorch nn.Linear-style init (uniform +/- 1/sqrt(fan_in)), packed into two slabs:
      w_slab (bf16): [W1 (in_pad x 128); W2 (128 x 128); W3 (128 x 128, zero-padded cols)]
      b_slab (f32) : [b1; b2; b3-padded]  -> (3, 128)
    Zero-padding is exact: zero x-columns / W1-rows contribute nothing; padded W3 columns
    are sliced off in the wrapper."""
    assert output_dim <= LANE, "packed-slab path assumes output_dim <= 128"

    def linear(k, fan_in, fan_out):
        kw, kb = jax.random.split(k)
        bound = 1.0 / jnp.sqrt(fan_in)
        w = jax.random.uniform(kw, (fan_in, fan_out), jnp.float32, -bound, bound)
        b = jax.random.uniform(kb, (fan_out,), jnp.float32, -bound, bound)
        return w, b

    k1, k2, k3 = jax.random.split(key, 3)
    w1, b1 = linear(k1, input_dim, hidden)
    w2, b2 = linear(k2, hidden, hidden)
    w3, b3 = linear(k3, hidden, output_dim)

    in_pad = _round_up(input_dim, LANE)                    # lane-dense x tile / clean K=128
    w1p = jnp.pad(w1, ((0, in_pad - input_dim), (0, 0)))   # zero rows: no effect on result
    w3p = jnp.pad(w3, ((0, 0), (0, LANE - output_dim)))    # zero cols: sliced off in wrapper
    b3p = jnp.pad(b3, (0, LANE - output_dim))

    w_slab = jnp.concatenate([w1p, w2, w3p], axis=0).astype(jnp.bfloat16)  # native MXU dtype
    b_slab = jnp.stack([b1, b2, b3p], axis=0)                              # (3, 128) f32

    return {"w_slab": w_slab, "b_slab": b_slab, "in_pad": in_pad,
            "out_dim": output_dim, "input_dim": input_dim,
            # unpacked f32 copies kept only for the reference checks
            "w1": w1, "b1": b1, "w2": w2, "b2": b2, "w3": w3, "b3": b3}


def dqn_reference_bf16(x, params):
    """Pure-JAX reference using the same bf16-matmul / f32-accumulate recipe as the kernel."""
    bf = jnp.bfloat16
    h1 = jnp.maximum(
        jnp.dot(x.astype(bf), params["w1"].astype(bf),
                preferred_element_type=jnp.float32) + params["b1"], 0.0)
    h2 = jnp.maximum(
        jnp.dot(h1.astype(bf), params["w2"].astype(bf),
                preferred_element_type=jnp.float32) + params["b2"], 0.0)
    return jnp.dot(h2.astype(bf), params["w3"].astype(bf),
                   preferred_element_type=jnp.float32) + params["b3"]


def dqn_reference_f32(x, params):
    h1 = jnp.maximum(x @ params["w1"] + params["b1"], 0.0)
    h2 = jnp.maximum(h1 @ params["w2"] + params["b2"], 0.0)
    return h2 @ params["w3"] + params["b3"]


if __name__ == "__main__":
    key = jax.random.PRNGKey(0)
    k_param, k_x = jax.random.split(key)

    batch, input_dim, output_dim = 8, 32, 8
    params = init_dqn_params(k_param, input_dim, output_dim)
    x = jax.random.normal(k_x, (batch, input_dim), dtype=jnp.float32)

    out = jax.block_until_ready(dqn_forward(x, params))

    assert out.shape == (batch, output_dim)
    # Tight check vs matching-precision (bf16 MXU) reference.
    ref_bf16 = dqn_reference_bf16(x, params)
    assert jnp.allclose(out, ref_bf16, atol=2e-3, rtol=2e-3), "mismatch vs bf16-matched reference"
    # Loose sanity check vs full-f32 reference (bf16 matmul quantization only).
    ref_f32 = dqn_reference_f32(x, params)
    assert jnp.allclose(out, ref_f32, atol=5e-2, rtol=5e-2), "mismatch vs f32 reference"

    print("KERNEL_OK")
</pallas_src>

<mosaic_0001>
module attributes {stable_mosaic.version = 11 : i64} {
  func.func @dqn_mlp_kernel(%arg0: i32, %arg1: memref<8x128xf32, #tpu.memory_space<vmem>>, %arg2: memref<384x128xbf16, #tpu.memory_space<vmem>>, %arg3: memref<3x128xf32, #tpu.memory_space<vmem>>, %arg4: memref<8x128xf32, #tpu.memory_space<vmem>>) attributes {dimension_semantics = [#tpu.dimension_semantics<parallel>], iteration_bounds = array<i64: 1>, scalar_prefetch = 0 : i64, scratch_operands = 0 : i64, tpu.core_type = #tpu.core_type<tc>, window_params = [{transform_indices = @transform_0, window_bounds = array<i64: 8, 128>}, {pipeline_mode = #tpu.pipeline_mode<synchronous>, transform_indices = @transform_1, window_bounds = array<i64: 384, 128>}, {pipeline_mode = #tpu.pipeline_mode<synchronous>, transform_indices = @transform_2, window_bounds = array<i64: 3, 128>}, {transform_indices = @transform_3, window_bounds = array<i64: 8, 128>}]} {
    %c0 = arith.constant 0 : index
    %c0_0 = arith.constant 0 : index
    %0 = vector.load %arg2[%c0, %c0_0] : memref<384x128xbf16, #tpu.memory_space<vmem>>, vector<128x128xbf16>
    %c128 = arith.constant 128 : index
    %c0_1 = arith.constant 0 : index
    %1 = vector.load %arg2[%c128, %c0_1] : memref<384x128xbf16, #tpu.memory_space<vmem>>, vector<128x128xbf16>
    %c256 = arith.constant 256 : index
    %c0_2 = arith.constant 0 : index
    %2 = vector.load %arg2[%c256, %c0_2] : memref<384x128xbf16, #tpu.memory_space<vmem>>, vector<128x128xbf16>
    %c0_3 = arith.constant 0 : index
    %c0_4 = arith.constant 0 : index
    %3 = vector.load %arg3[%c0_3, %c0_4] : memref<3x128xf32, #tpu.memory_space<vmem>>, vector<3x128xf32>
    %4 = vector.extract_strided_slice %3 {offsets = [0, 0], sizes = [1, 128], strides = [1, 1]} : vector<3x128xf32> to vector<1x128xf32>
    %5 = vector.extract_strided_slice %3 {offsets = [1, 0], sizes = [1, 128], strides = [1, 1]} : vector<3x128xf32> to vector<1x128xf32>
    %6 = vector.extract_strided_slice %3 {offsets = [2, 0], sizes = [1, 128], strides = [1, 1]} : vector<3x128xf32> to vector<1x128xf32>
    %c0_5 = arith.constant 0 : index
    %c0_6 = arith.constant 0 : index
    %7 = vector.load %arg1[%c0_5, %c0_6] : memref<8x128xf32, #tpu.memory_space<vmem>>, vector<8x128xf32>
    %8 = arith.truncf %7 : vector<8x128xf32> to vector<8x128xbf16>
    %cst = arith.constant dense<0.000000e+00> : vector<8x128xf32>
    %9 = tpu.matmul %8, %0, %cst {dimension_numbers = #tpu.dot_dimension_numbers<[1], [0], [0], [1], [0, 0, 1, 1], [], []>} : vector<8x128xbf16>, vector<128x128xbf16>, vector<8x128xf32> -> vector<8x128xf32>
    %10 = vector.broadcast %4 : vector<1x128xf32> to vector<8x128xf32>
    %11 = arith.addf %9, %10 : vector<8x128xf32>
    %cst_7 = arith.constant 0.000000e+00 : f32
    %12 = vector.broadcast %cst_7 : f32 to vector<8x128xf32>
    %13 = arith.maximumf %11, %12 : vector<8x128xf32>
    %14 = arith.truncf %13 : vector<8x128xf32> to vector<8x128xbf16>
    %cst_8 = arith.constant dense<0.000000e+00> : vector<8x128xf32>
    %15 = tpu.matmul %14, %1, %cst_8 {dimension_numbers = #tpu.dot_dimension_numbers<[1], [0], [0], [1], [0, 0, 1, 1], [], []>} : vector<8x128xbf16>, vector<128x128xbf16>, vector<8x128xf32> -> vector<8x128xf32>
    %16 = vector.broadcast %5 : vector<1x128xf32> to vector<8x128xf32>
    %17 = arith.addf %15, %16 : vector<8x128xf32>
    %cst_9 = arith.constant 0.000000e+00 : f32
    %18 = vector.broadcast %cst_9 : f32 to vector<8x128xf32>
    %19 = arith.maximumf %17, %18 : vector<8x128xf32>
    %20 = arith.truncf %19 : vector<8x128xf32> to vector<8x128xbf16>
    %cst_10 = arith.constant dense<0.000000e+00> : vector<8x128xf32>
    %21 = tpu.matmul %20, %2, %cst_10 {dimension_numbers = #tpu.dot_dimension_numbers<[1], [0], [0], [1], [0, 0, 1, 1], [], []>} : vector<8x128xbf16>, vector<128x128xbf16>, vector<8x128xf32> -> vector<8x128xf32>
    %22 = vector.broadcast %6 : vector<1x128xf32> to vector<8x128xf32>
    %23 = arith.addf %21, %22 : vector<8x128xf32>
    %c0_11 = arith.constant 0 : index
    %c0_12 = arith.constant 0 : index
    %24 = vector.load %arg4[%c0_11, %c0_12] : memref<8x128xf32, #tpu.memory_space<vmem>>, vector<8x128xf32>
    tpu.vector_store %arg4[%c0_11, %c0_12], %23 {strides = array<i32>} : memref<8x128xf32, #tpu.memory_space<vmem>>, vector<8x128xf32>,
    return
  }
  func.func @transform_0(%arg0: i32) -> (i32, i32) {
    %c0_i32 = arith.constant 0 : i32
    %c0_i32_0 = arith.constant 0 : i32
    return %arg0, %c0_i32 : i32, i32
  }
  func.func @transform_1(%arg0: i32) -> (i32, i32) {
    %c0_i32 = arith.constant 0 : i32
    %c0_i32_0 = arith.constant 0 : i32
    %c0_i32_1 = arith.constant 0 : i32
    return %c0_i32, %c0_i32_0 : i32, i32
  }
  func.func @transform_2(%arg0: i32) -> (i32, i32) {
    %c0_i32 = arith.constant 0 : i32
    %c0_i32_0 = arith.constant 0 : i32
    %c0_i32_1 = arith.constant 0 : i32
    return %c0_i32, %c0_i32_0 : i32, i32
  }
  func.func @transform_3(%arg0: i32) -> (i32, i32) {
    %c0_i32 = arith.constant 0 : i32
    %c0_i32_0 = arith.constant 0 : i32
    return %arg0, %c0_i32 : i32, i32
  }
}

</mosaic_0001>

<llo_original>
// kernel: tpu_custom_call.1
$region0: #{tpu_custom_call.1}
  #allocation0 [shape = 'u32[]', space=smem, size = 0x4, offset = 0x4, fixed_abs, tag = 'smem constant byte address 0x4 - core index']
  #allocation1 [shape = 'u32[144,128]{1,0:T(1,128)}', space=vmem, size = 0x12000, scoped, tag = 'internal scratch']
  %s0 = inlined_call_operand.hbm [shape: f32[8,128], index: 0, kind: input, shape index: {}]
  %s1 = inlined_call_operand.hbm [shape: bf16[384,128], index: 1, kind: input, shape index: {}]
  %s2 = inlined_call_operand.hbm [shape: f32[3,128], index: 2, kind: input, shape index: {}]
  %s3 = inlined_call_operand.hbm [shape: f32[8,128], index: 3, kind: output, shape index: {}]
  %s4 = sld [smem:[#allocation0]]
  $region34: #{tpu_custom_call.1} parent=0
    _
  %s6 = ssub.s32 1, %s4
  %s7 = scalar_select 0, %s6, %s4
  $region1: #{tpu_custom_call.1} parent=0
    #allocation2 [shape = 'u8[4096]{0}', space=vmem, size = 0x1000, scoped, tag = 'input window, operand 0, single buffered']
    #allocation3 [shape = 's32[1]{0}', space=sflag, size = 0x4, scoped, tag = 'scoped memory for tpu_custom_call.1']
    #allocation4 [shape = 's32[1]{0}', space=sflag, size = 0x4, scoped, tag = 'scoped memory for tpu_custom_call.1']
    #allocation5 [shape = 'u8[98304]{0}', space=vmem, size = 0x18000, scoped, tag = 'input window, operand 1, single buffered']
    #allocation6 [shape = 's32[1]{0}', space=sflag, size = 0x4, scoped, tag = 'scoped memory for tpu_custom_call.1']
    #allocation7 [shape = 'u8[2048]{0}', space=vmem, size = 0x800, scoped, tag = 'input window, operand 2, single buffered']
    #allocation8 [shape = 'u8[4096]{0}', space=vmem, size = 0x1000, scoped, tag = 'output window, operand 0, single buffered']
    %8 = vsyncpa [#allocation3], 0
    %9 = vsyncpa [#allocation6], 0
    %10 = vsyncpa [#allocation4], 0
    // Predicated region
    $region2: #{tpu_custom_call.1} parent=1 // pred_check
      _
    $region3: #{tpu_custom_call.1} parent=1 // pred_check_branch
      %12 = sbr.rel (0) target = $region5
    $region4: #{tpu_custom_call.1} parent=1 // pred_region
      %s14 = ssub.s32 128, 128
      %15 = vsyncadd [#allocation3], %s14
      %s17 = sshll.u32 [#allocation2], 4
      %s18 = int_to_ptr.vmem [resolvable:$true] %s17
      %20 = dma.hbm_to_vmem [thread:$0]  %s0, 128, %s18, [#allocation3]
    $region5: #{tpu_custom_call.1} parent=1 // pred_fallthru
      _
    // Predicated region
    $region6: #{tpu_custom_call.1} parent=1 // pred_check
      _
    $region7: #{tpu_custom_call.1} parent=1 // pred_check_branch
      %22 = sbr.rel (0) target = $region9
    $region8: #{tpu_custom_call.1} parent=1 // pred_region
      %s24 = ssub.s32 3072, 3072
      %25 = vsyncadd [#allocation6], %s24
      %s26 = sshll.u32 [#allocation5], 4
      %s27 = int_to_ptr.vmem [resolvable:$true] %s26
      %32 = dma.hbm_to_vmem [thread:$0]  %s1, 3072, %s27, [#allocation6], 64, 64, 4
    $region9: #{tpu_custom_call.1} parent=1 // pred_fallthru
      _
    // Predicated region
    $region10: #{tpu_custom_call.1} parent=1 // pred_check
      _
    $region11: #{tpu_custom_call.1} parent=1 // pred_check_branch
      %34 = sbr.rel (0) target = $region13
    $region12: #{tpu_custom_call.1} parent=1 // pred_region
      %s36 = ssub.s32 64, 64
      %37 = vsyncadd [#allocation6], %s36
      %s39 = sshll.u32 [#allocation7], 4
      %s40 = int_to_ptr.vmem [resolvable:$true] %s39
      %42 = dma.hbm_to_vmem [thread:$0]  %s2, 64, %s40, [#allocation6]
    $region13: #{tpu_custom_call.1} parent=1 // pred_fallthru
      _
    // Predicated region
    $region14: #{tpu_custom_call.1} parent=1 // pred_check
      _
    $region15: #{tpu_custom_call.1} parent=1 // pred_check_branch
      %44 = sbr.rel (0) target = $region17
    $region16: #{tpu_custom_call.1} parent=1 // pred_region
      %45 = dma.done [#allocation3], 128
    $region17: #{tpu_custom_call.1} parent=1 // pred_fallthru
      _
    // Predicated region
    $region18: #{tpu_custom_call.1} parent=1 // pred_check
      _
    $region19: #{tpu_custom_call.1} parent=1 // pred_check_branch
      %47 = sbr.rel (0) target = $region21
    $region20: #{tpu_custom_call.1} parent=1 // pred_region
      %48 = dma.done [#allocation6], 3072
    $region21: #{tpu_custom_call.1} parent=1 // pred_fallthru
      _
    // Predicated region
    $region22: #{tpu_custom_call.1} parent=1 // pred_check
      _
    $region23: #{tpu_custom_call.1} parent=1 // pred_check_branch
      %50 = sbr.rel (0) target = $region25
    $region24: #{tpu_custom_call.1} parent=1 // pred_region
      %51 = dma.done [#allocation6], 64
    $region25: #{tpu_custom_call.1} parent=1 // pred_fallthru
      _
    %v53 = vld [vmem:[#allocation5] sm:$0xf]
    %v54 = vld [vmem:[#allocation5 + $0x4] sm:$0xf]
    %v55 = vld [vmem:[#allocation5 + $0x8] sm:$0xf]
    %v56 = vld [vmem:[#allocation5 + $0xc] sm:$0xf]
    %v57 = vld [vmem:[#allocation5 + $0x10] sm:$0xf]
    %v58 = vld [vmem:[#allocation5 + $0x14] sm:$0xf]
    %v59 = vld [vmem:[#allocation5 + $0x18] sm:$0xf]
    %v60 = vld [vmem:[#allocation5 + $0x1c] sm:$0xf]
    %v61 = vld [vmem:[#allocation5 + $0x20] sm:$0xf]
    %v62 = vld [vmem:[#allocation5 + $0x24] sm:$0xf]
    %v63 = vld [vmem:[#allocation5 + $0x28] sm:$0xf]
    %v64 = vld [vmem:[#allocation5 + $0x2c] sm:$0xf]
    %v65 = vld [vmem:[#allocation5 + $0x30] sm:$0xf]
    %v66 = vld [vmem:[#allocation5 + $0x34] sm:$0xf]
    %v67 = vld [vmem:[#allocation5 + $0x38] sm:$0xf]
    %v68 = vld [vmem:[#allocation5 + $0x3c] sm:$0xf]
    %v69 = vld [vmem:[#allocation5 + $0x40] sm:$0xf]
    %v70 = vld [vmem:[#allocation5 + $0x44] sm:$0xf]
    %v71 = vld [vmem:[#allocation5 + $0x48] sm:$0xf]
    %v72 = vld [vmem:[#allocation5 + $0x4c] sm:$0xf]
    %v73 = vld [vmem:[#allocation5 + $0x50] sm:$0xf]
    %v74 = vld [vmem:[#allocation5 + $0x54] sm:$0xf]
    %v75 = vld [vmem:[#allocation5 + $0x58] sm:$0xf]
    %v76 = vld [vmem:[#allocation5 + $0x5c] sm:$0xf]
    %v77 = vld [vmem:[#allocation5 + $0x60] sm:$0xf]
    %v78 = vld [vmem:[#allocation5 + $0x64] sm:$0xf]
    %v79 = vld [vmem:[#allocation5 + $0x68] sm:$0xf]
    %v80 = vld [vmem:[#allocation5 + $0x6c] sm:$0xf]
    %v81 = vld [vmem:[#allocation5 + $0x70] sm:$0xf]
    %v82 = vld [vmem:[#allocation5 + $0x74] sm:$0xf]
    %v83 = vld [vmem:[#allocation5 + $0x78] sm:$0xf]
    %v84 = vld [vmem:[#allocation5 + $0x7c] sm:$0xf]
    %v85 = vld [vmem:[#allocation5 + $0x80] sm:$0xf]
    %v86 = vld [vmem:[#allocation5 + $0x84] sm:$0xf]
    %v87 = vld [vmem:[#allocation5 + $0x88] sm:$0xf]
    %v88 = vld [vmem:[#allocation5 + $0x8c] sm:$0xf]
    %v89 = vld [vmem:[#allocation5 + $0x90] sm:$0xf]
    %v90 = vld [vmem:[#allocation5 + $0x94] sm:$0xf]
    %v91 = vld [vmem:[#allocation5 + $0x98] sm:$0xf]
    %v92 = vld [vmem:[#allocation5 + $0x9c] sm:$0xf]
    %v93 = vld [vmem:[#allocation5 + $0xa0] sm:$0xf]
    %v94 = vld [vmem:[#allocation5 + $0xa4] sm:$0xf]
    %v95 = vld [vmem:[#allocation5 + $0xa8] sm:$0xf]
    %v96 = vld [vmem:[#allocation5 + $0xac] sm:$0xf]
    %v97 = vld [vmem:[#allocation5 + $0xb0] sm:$0xf]
    %v98 = vld [vmem:[#allocation5 + $0xb4] sm:$0xf]
    %v99 = vld [vmem:[#allocation5 + $0xb8] sm:$0xf]
    %v100 = vld [vmem:[#allocation5 + $0xbc] sm:$0xf]
    %v101 = vld [vmem:[#allocation7] sm:$0x7]
    %v102 = vld [vmem:[#allocation2] sm:$0xff]
    %v103 = vpack.c.bf16 %v102, %v102
    %v104 = vlaneseq
    %v105 = vshrl.u32 %v104, 7
    %v106 = vsub.s32 0, %v105
    %v107 = vrot.slane %v101, %v106
    %v124 = vunpack.c.l.b16 %v53
    %v125 = vunpack.c.l.b16 %v54
    %v126 = vunpack.c.l.b16 %v55
    %v127 = vunpack.c.l.b16 %v56
    %v128 = vunpack.c.l.b16 %v57
    %v129 = vunpack.c.l.b16 %v58
    %v130 = vunpack.c.l.b16 %v59
    %v131 = vunpack.c.l.b16 %v60
    %v132 = vunpack.c.l.b16 %v61
    %v133 = vunpack.c.l.b16 %v62
    %v134 = vunpack.c.l.b16 %v63
    %v135 = vunpack.c.l.b16 %v64
    %v136 = vunpack.c.l.b16 %v65
    %v137 = vunpack.c.l.b16 %v66
    %v138 = vunpack.c.l.b16 %v67
    %v139 = vunpack.c.l.b16 %v68
    %v140 = vpack.c.b16 %v125, %v124
    %v141 = vpack.c.b16 %v127, %v126
    %v142 = vpack.c.b16 %v129, %v128
    %v143 = vpack.c.b16 %v131, %v130
    %v144 = vpack.c.b16 %v133, %v132
    %v145 = vpack.c.b16 %v135, %v134
    %v146 = vpack.c.b16 %v137, %v136
    %v147 = vpack.c.b16 %v139, %v138
    %156 = vmatprep.subr.bf16.mxu0 0
    %157 = vmatpush1.bf16.msra.mxu0 %v147
    %158 = vmatprep.subr.bf16.mxu0 0
    %159 = vmatpush1.bf16.msra.mxu0 %v146
    %160 = vmatprep.subr.bf16.mxu0 0
    %161 = vmatpush1.bf16.msra.mxu0 %v145
    %162 = vmatprep.subr.bf16.mxu0 0
    %163 = vmatpush1.bf16.msra.mxu0 %v144
    %164 = vmatprep.subr.bf16.mxu0 0
    %165 = vmatpush1.bf16.msra.mxu0 %v143
    %166 = vmatprep.subr.bf16.mxu0 0
    %167 = vmatpush1.bf16.msra.mxu0 %v142
    %168 = vmatprep.subr.bf16.mxu0 0
    %169 = vmatpush1.bf16.msra.mxu0 %v141
    %170 = vmatprep.subr.bf16.mxu0 0
    %171 = vmatpush1.bf16.msra.mxu0 %v140
    %172 = vmatprep.subr.bf16.mxu0 0
    %173 = vmatpush2.bf16.msra.mxu0 0
    %174 = vmatprep.subr.bf16.mxu0 0
    %175 = vmatpush2.bf16.msra.mxu0 0
    %176 = vmatprep.subr.bf16.mxu0 0
    %177 = vmatpush2.bf16.msra.mxu0 0
    %178 = vmatprep.subr.bf16.mxu0 0
    %179 = vmatpush2.bf16.msra.mxu0 0
    %180 = vmatprep.subr.bf16.mxu0 0
    %181 = vmatpush2.bf16.msra.mxu0 0
    %182 = vmatprep.subr.bf16.mxu0 0
    %183 = vmatpush2.bf16.msra.mxu0 0
    %184 = vmatprep.subr.bf16.mxu0 0
    %185 = vmatpush2.bf16.msra.mxu0 0
    %186 = vmatprep.subr.bf16.mxu0 0
    %187 = vmatpush2.bf16.msra.mxu0 0
    %188 = vmatprep.mubr.bf16.mxu0 0
    %189 = vmatmul.mubr.bf16.gmra.mxu0 %v103
    %v190 = vpop.f32.mrf.mxu0
    %v191 = vadd.f32 %v107, %v190
    %v192 = vpop.f32.mrf.mxu0
    %v193 = vpop.f32.mrf.mxu0
    %v194 = vpop.f32.mrf.mxu0
    %195 = vdwg.mxu0
    %v196 = vmax.f32 %v191, 0.0
    %v197 = vpack.c.bf16 %v196, %v196
    %v198 = vlaneseq
    %v199 = vshrl.u32 %v198, 7
    %v200 = vsub.s32 1, %v199
    %v201 = vrot.slane %v101, %v200
    %v218 = vunpack.c.l.b16 %v69
    %v219 = vunpack.c.l.b16 %v70
    %v220 = vunpack.c.l.b16 %v71
    %v221 = vunpack.c.l.b16 %v72
    %v222 = vunpack.c.l.b16 %v73
    %v223 = vunpack.c.l.b16 %v74
    %v224 = vunpack.c.l.b16 %v75
    %v225 = vunpack.c.l.b16 %v76
    %v226 = vunpack.c.l.b16 %v77
    %v227 = vunpack.c.l.b16 %v78
    %v228 = vunpack.c.l.b16 %v79
    %v229 = vunpack.c.l.b16 %v80
    %v230 = vunpack.c.l.b16 %v81
    %v231 = vunpack.c.l.b16 %v82
    %v232 = vunpack.c.l.b16 %v83
    %v233 = vunpack.c.l.b16 %v84
    %v234 = vpack.c.b16 %v219, %v218
    %v235 = vpack.c.b16 %v221, %v220
    %v236 = vpack.c.b16 %v223, %v222
    %v237 = vpack.c.b16 %v225, %v224
    %v238 = vpack.c.b16 %v227, %v226
    %v239 = vpack.c.b16 %v229, %v228
    %v240 = vpack.c.b16 %v231, %v230
    %v241 = vpack.c.b16 %v233, %v232
    %250 = vmatprep.subr.bf16.mxu0 0
    %251 = vmatpush1.bf16.msra.mxu0 %v241
    %252 = vmatprep.subr.bf16.mxu0 0
    %253 = vmatpush1.bf16.msra.mxu0 %v240
    %254 = vmatprep.subr.bf16.mxu0 0
    %255 = vmatpush1.bf16.msra.mxu0 %v239
    %256 = vmatprep.subr.bf16.mxu0 0
    %257 = vmatpush1.bf16.msra.mxu0 %v238
    %258 = vmatprep.subr.bf16.mxu0 0
    %259 = vmatpush1.bf16.msra.mxu0 %v237
    %260 = vmatprep.subr.bf16.mxu0 0
    %261 = vmatpush1.bf16.msra.mxu0 %v236
    %262 = vmatprep.subr.bf16.mxu0 0
    %263 = vmatpush1.bf16.msra.mxu0 %v235
    %264 = vmatprep.subr.bf16.mxu0 0
    %265 = vmatpush1.bf16.msra.mxu0 %v234
    %266 = vmatprep.subr.bf16.mxu0 0
    %267 = vmatpush2.bf16.msra.mxu0 0
    %268 = vmatprep.subr.bf16.mxu0 0
    %269 = vmatpush2.bf16.msra.mxu0 0
    %270 = vmatprep.subr.bf16.mxu0 0
    %271 = vmatpush2.bf16.msra.mxu0 0
    %272 = vmatprep.subr.bf16.mxu0 0
    %273 = vmatpush2.bf16.msra.mxu0 0
    %274 = vmatprep.subr.bf16.mxu0 0
    %275 = vmatpush2.bf16.msra.mxu0 0
    %276 = vmatprep.subr.bf16.mxu0 0
    %277 = vmatpush2.bf16.msra.mxu0 0
    %278 = vmatprep.subr.bf16.mxu0 0
    %279 = vmatpush2.bf16.msra.mxu0 0
    %280 = vmatprep.subr.bf16.mxu0 0
    %281 = vmatpush2.bf16.msra.mxu0 0
    %282 = vmatprep.mubr.bf16.mxu0 0
    %283 = vmatmul.mubr.bf16.gmra.mxu0 %v197
    %v284 = vpop.f32.mrf.mxu0
    %v285 = vadd.f32 %v201, %v284
    %v286 = vpop.f32.mrf.mxu0
    %v287 = vpop.f32.mrf.mxu0
    %v288 = vpop.f32.mrf.mxu0
    %289 = vdwg.mxu0
    %v290 = vmax.f32 %v285, 0.0
    %v291 = vpack.c.bf16 %v290, %v290
    %v292 = vlaneseq
    %v293 = vshrl.u32 %v292, 7
    %v294 = vsub.s32 2, %v293
    %v295 = vrot.slane %v101, %v294
    %v312 = vunpack.c.l.b16 %v85
    %v313 = vunpack.c.l.b16 %v86
    %v314 = vunpack.c.l.b16 %v87
    %v315 = vunpack.c.l.b16 %v88
    %v316 = vunpack.c.l.b16 %v89
    %v317 = vunpack.c.l.b16 %v90
    %v318 = vunpack.c.l.b16 %v91
    %v319 = vunpack.c.l.b16 %v92
    %v320 = vunpack.c.l.b16 %v93
    %v321 = vunpack.c.l.b16 %v94
    %v322 = vunpack.c.l.b16 %v95
    %v323 = vunpack.c.l.b16 %v96
    %v324 = vunpack.c.l.b16 %v97
    %v325 = vunpack.c.l.b16 %v98
    %v326 = vunpack.c.l.b16 %v99
    %v327 = vunpack.c.l.b16 %v100
    %v328 = vpack.c.b16 %v313, %v312
    %v329 = vpack.c.b16 %v315, %v314
    %v330 = vpack.c.b16 %v317, %v316
    %v331 = vpack.c.b16 %v319, %v318
    %v332 = vpack.c.b16 %v321, %v320
    %v333 = vpack.c.b16 %v323, %v322
    %v334 = vpack.c.b16 %v325, %v324
    %v335 = vpack.c.b16 %v327, %v326
    %344 = vmatprep.subr.bf16.mxu0 0
    %345 = vmatpush1.bf16.msra.mxu0 %v335
    %346 = vmatprep.subr.bf16.mxu0 0
    %347 = vmatpush1.bf16.msra.mxu0 %v334
    %348 = vmatprep.subr.bf16.mxu0 0
    %349 = vmatpush1.bf16.msra.mxu0 %v333
    %350 = vmatprep.subr.bf16.mxu0 0
    %351 = vmatpush1.bf16.msra.mxu0 %v332
    %352 = vmatprep.subr.bf16.mxu0 0
    %353 = vmatpush1.bf16.msra.mxu0 %v331
    %354 = vmatprep.subr.bf16.mxu0 0
    %355 = vmatpush1.bf16.msra.mxu0 %v330
    %356 = vmatprep.subr.bf16.mxu0 0
    %357 = vmatpush1.bf16.msra.mxu0 %v329
    %358 = vmatprep.subr.bf16.mxu0 0
    %359 = vmatpush1.bf16.msra.mxu0 %v328
    %360 = vmatprep.subr.bf16.mxu0 0
    %361 = vmatpush2.bf16.msra.mxu0 0
    %362 = vmatprep.subr.bf16.mxu0 0
    %363 = vmatpush2.bf16.msra.mxu0 0
    %364 = vmatprep.subr.bf16.mxu0 0
    %365 = vmatpush2.bf16.msra.mxu0 0
    %366 = vmatprep.subr.bf16.mxu0 0
    %367 = vmatpush2.bf16.msra.mxu0 0
    %368 = vmatprep.subr.bf16.mxu0 0
    %369 = vmatpush2.bf16.msra.mxu0 0
    %370 = vmatprep.subr.bf16.mxu0 0
    %371 = vmatpush2.bf16.msra.mxu0 0
    %372 = vmatprep.subr.bf16.mxu0 0
    %373 = vmatpush2.bf16.msra.mxu0 0
    %374 = vmatprep.subr.bf16.mxu0 0
    %375 = vmatpush2.bf16.msra.mxu0 0
    %376 = vmatprep.mubr.bf16.mxu0 0
    %377 = vmatmul.mubr.bf16.gmra.mxu0 %v291
    %v378 = vpop.f32.mrf.mxu0
    %v379 = vadd.f32 %v295, %v378
    %v380 = vpop.f32.mrf.mxu0
    %v381 = vpop.f32.mrf.mxu0
    %v382 = vpop.f32.mrf.mxu0
    %383 = vdwg.mxu0
    %384 = vst [vmem:[#allocation8] sm:$0xff] %v379
    // Predicated region
    $region26: #{tpu_custom_call.1} parent=1 // pred_check
      _
    $region27: #{tpu_custom_call.1} parent=1 // pred_check_branch
      %386 = sbr.rel (0) target = $region29
    $region28: #{tpu_custom_call.1} parent=1 // pred_region
      %s388 = ssub.s32 128, 128
      %389 = vsyncadd [#allocation4], %s388
      %s391 = sshll.u32 [#allocation8], 4
      %s392 = int_to_ptr.vmem [resolvable:$true] %s391
      %394 = dma.vmem_to_hbm [thread:$0]  %s392, 128, %s3, [#allocation4]
    $region29: #{tpu_custom_call.1} parent=1 // pred_fallthru
      _
    // Predicated region
    $region30: #{tpu_custom_call.1} parent=1 // pred_check
      _
    $region31: #{tpu_custom_call.1} parent=1 // pred_check_branch
      %396 = sbr.rel (0) target = $region33
    $region32: #{tpu_custom_call.1} parent=1 // pred_region
      %397 = dma.done [#allocation4], 128
    $region33: #{tpu_custom_call.1} parent=1 // pred_fallthru
      _
    %398 = vsyncpa [#allocation3], 1
    %399 = vsyncpa [#allocation6], 1
    %400 = vsyncpa [#allocation4], 1

</llo_original>
